<compile_context>
chip_gen: v5e
topology: v5e:2x2
jax: 0.10.0
libtpu: 0.0.40
codegen_flags: <defaults>
</compile_context>

<pallas_src>
import jax
import jax.numpy as jnp
from jax.experimental import pallas as pl
from jax.experimental.pallas import tpu as pltpu


# ----------------------------- config (small) --------------------------------
B = 2            # batch
S = 16           # sequence length
E = 32           # embed_dim (BERT hidden, shrunk)
C = 32           # compressd_embed_dim
M = 32           # merged_embed_dim
N = 8            # max_ent_len
R = 16           # max_role_len
H = 64           # classifier hidden (fixed 64 in the module)
EVT = 4          # event_num
VOCAB = 128


# ------------------------------- Pallas kernel --------------------------------
def segeae_kernel(evt_ref,                 # SMEM (B,) int32   event type per batch
                  mask_ref,                # VMEM (2*B*N, B*S) block-diag masks
                  sent_ref,                # VMEM (B*S, E)     flattened sent embeds
                  wc_ref, bc_ref,          # VMEM (E, C), (1, C)   compress_embed_layer
                  wm_ref, bm_ref,          # VMEM (2C, M), (1, M)  mention_merge_layer
                  w1_ref, b1_ref,          # VMEM (EVT, M, H), (EVT, 1, H)
                  w2_ref, b2_ref,          # VMEM (EVT, H, R), (EVT, 1, R)
                  out_ref):                # VMEM (B, N, R)
    f32, bf16 = jnp.float32, jnp.bfloat16

    # EncoderLayer bmm, all batches fused via the block-diagonal mask:
    #   rows [0, B*N)      -> arg mention rows (batch-major)
    #   rows [B*N, 2*B*N)  -> event mention row of batch b repeated N times
    emb = jnp.dot(mask_ref[...].astype(bf16), sent_ref[...].astype(bf16),
                  preferred_element_type=f32)                        # (2BN, E)

    # compress_embed_layer (Linear + ReLU) for all arg + event rows in one dot.
    comp = jnp.maximum(
        jnp.dot(emb.astype(bf16), wc_ref[...].astype(bf16),
                preferred_element_type=f32) + bc_ref[...], 0.0)      # (2BN, C)
    arg_c = comp[:B * N, :]          # (BN, C)
    evt_c = comp[B * N:, :]          # (BN, C): row b*N+i == event embed of batch b

    # mention_merge_layer:
    #   relu(cat([arg_c, evt_c], -1) @ Wm + bm)
    #   == relu(arg_c @ Wm[:C] + evt_c @ Wm[C:] + bm)   (exact split, no concat)
    merged = (jnp.dot(arg_c.astype(bf16), wm_ref[:C, :].astype(bf16),
                      preferred_element_type=f32)
              + jnp.dot(evt_c.astype(bf16), wm_ref[C:, :].astype(bf16),
                        preferred_element_type=f32))
    merged = jnp.maximum(merged + bm_ref[...], 0.0)                  # (BN, M)

    # Per-event classifier: Linear(M,64)+ReLU+Linear(64,R), weights selected
    # in-kernel from the resident tables. Events differ per example, so this
    # stays a tiny static loop (B=2); for larger B use lax.fori_loop / a grid.
    for b in range(B):
        e = evt_ref[b]
        mb = merged[b * N:(b + 1) * N, :].astype(bf16)               # (N, M)
        h = jnp.maximum(
            jnp.dot(mb, w1_ref[e].astype(bf16), preferred_element_type=f32)
            + b1_ref[e], 0.0)                                        # (N, H)
        out_ref[b] = (jnp.dot(h.astype(bf16), w2_ref[e].astype(bf16),
                              preferred_element_type=f32) + b2_ref[e])


def segeae_forward(evt_type, sent_embeds, arg_mask, evt_mask,
                   wc, bc, wm, bm, w1, b1, w2, b2):
    """Hot path of SelfEnhancingGraphEAE.forward (use_seg=False)."""
    # Wrapper-side block-diagonal packing of the per-batch masks so the kernel
    # runs one fused matmul per stage over ALL batches.  In production this
    # layout would be produced upstream instead of re-packed per call.
    eye = jnp.eye(B, dtype=arg_mask.dtype)

    def blockdiag(m):                       # (B, rows, S) -> (B*rows, B*S)
        rows = m.shape[1]
        return (m[:, None, :, :] * eye[:, :, None, None]
                ).transpose(0, 2, 1, 3).reshape(B * rows, B * S)

    mask_bd = jnp.concatenate(
        [blockdiag(arg_mask),
         blockdiag(jnp.broadcast_to(evt_mask, (B, N, S)))], axis=0)  # (2BN, BS)
    sent_flat = sent_embeds.reshape(B * S, E)                        # (BS, E)

    vmem = lambda: pl.BlockSpec(memory_space=pltpu.MemorySpace.VMEM)
    smem = pl.BlockSpec(memory_space=pltpu.MemorySpace.SMEM)

    return pl.pallas_call(
        segeae_kernel,
        out_shape=jax.ShapeDtypeStruct((B, N, R), jnp.float32),
        in_specs=[smem,            # evt_type -> SMEM scalars
                  vmem(), vmem(),  # block-diag mask, flattened sent embeds
                  vmem(), vmem(),  # Wc, bc
                  vmem(), vmem(),  # Wm, bm
                  vmem(), vmem(),  # W1 table, b1 table
                  vmem(), vmem()], # W2 table, b2 table
        out_specs=vmem(),
    )(evt_type, mask_bd, sent_flat, wc, bc, wm, bm, w1, b1, w2, b2)


# ------------------------------ reference (JAX) --------------------------------
def segeae_reference(evt_type, sent_embeds, arg_mask, evt_mask,
                     wc, bc, wm, bm, w1, b1, w2, b2):
    relu = lambda x: jnp.maximum(x, 0.0)
    arg_emb = jnp.einsum('bns,bse->bne', arg_mask, sent_embeds)
    evt_emb = jnp.einsum('bos,bse->boe', evt_mask, sent_embeds)
    arg_c = relu(arg_emb @ wc + bc)
    evt_c = relu(evt_emb @ wc + bc)
    merged = relu(jnp.concatenate(
        [arg_c, jnp.broadcast_to(evt_c, (B, N, C))], axis=-1) @ wm + bm)
    w1s, b1s, w2s, b2s = w1[evt_type], b1[evt_type], w2[evt_type], b2[evt_type]
    h = relu(jnp.einsum('bnm,bmh->bnh', merged, w1s) + b1s)
    return jnp.einsum('bnh,bhr->bnr', h, w2s) + b2s


# ---------------------------------- main ---------------------------------------
if __name__ == "__main__":
    key = jax.random.PRNGKey(0)
    ks = jax.random.split(key, 12)

    def lin_init(k, fan_in, shape):
        bound = 1.0 / jnp.sqrt(fan_in)
        return jax.random.uniform(k, shape, jnp.float32, -bound, bound)

    # Parameters (deterministic, PyTorch-default-like uniform init).
    embed_table = jax.random.normal(ks[0], (VOCAB, E), jnp.float32) * 0.02
    wc = lin_init(ks[1], E, (E, C));         bc = lin_init(ks[2], E, (1, C))
    wm = lin_init(ks[3], 2 * C, (2 * C, M)); bm = lin_init(ks[4], 2 * C, (1, M))
    w1 = lin_init(ks[5], M, (EVT, M, H));    b1 = lin_init(ks[6], M, (EVT, 1, H))
    w2 = lin_init(ks[7], H, (EVT, H, R));    b2 = lin_init(ks[8], H, (EVT, 1, R))

    # Inputs.
    sent_token_ids = jax.random.randint(ks[9], (B, S), 0, VOCAB, jnp.int32)
    evt_type_list = jax.random.randint(ks[10], (B,), 0, EVT, jnp.int32)
    arg_mask_list = (jax.random.uniform(ks[11], (B, N, S)) > 0.5).astype(jnp.float32)
    evt_mention_mask_list = jnp.zeros((B, 1, S), jnp.float32).at[:, 0, 0].set(1.0)
    # arg_padding_mask_list / arg_padding_num_list are unused in the forward math.

    # Glue: BERT stub -> embedding lookup (plain JAX).
    sent_embeds = embed_table[sent_token_ids]          # (B, S, E)

    out = segeae_forward(evt_type_list, sent_embeds, arg_mask_list,
                         evt_mention_mask_list,
                         wc, bc, wm, bm, w1, b1, w2, b2)
    out = jax.block_until_ready(out)

    ref = segeae_reference(evt_type_list, sent_embeds, arg_mask_list,
                           evt_mention_mask_list,
                           wc, bc, wm, bm, w1, b1, w2, b2)
    assert out.shape == (B, N, R)
    # Tolerance widened vs. the pure-f32 version because the kernel now uses
    # bf16 MXU operands with f32 accumulation (per the perf review); the
    # expected deviation from the f32 reference is ~1e-3 at these magnitudes.
    assert jnp.allclose(out, ref, atol=1e-2, rtol=1e-2), "mismatch vs reference"
    print("KERNEL_OK")
</pallas_src>

<mosaic_0001>
module attributes {stable_mosaic.version = 11 : i64} {
  func.func @segeae_kernel(%arg0: memref<2xi32, #tpu.memory_space<smem>>, %arg1: memref<32x32xf32, #tpu.memory_space<vmem>>, %arg2: memref<32x32xf32, #tpu.memory_space<vmem>>, %arg3: memref<32x32xf32, #tpu.memory_space<vmem>>, %arg4: memref<1x32xf32, #tpu.memory_space<vmem>>, %arg5: memref<64x32xf32, #tpu.memory_space<vmem>>, %arg6: memref<1x32xf32, #tpu.memory_space<vmem>>, %arg7: memref<4x32x64xf32, #tpu.memory_space<vmem>>, %arg8: memref<4x1x64xf32, #tpu.memory_space<vmem>>, %arg9: memref<4x64x16xf32, #tpu.memory_space<vmem>>, %arg10: memref<4x1x16xf32, #tpu.memory_space<vmem>>, %arg11: memref<2x8x16xf32, #tpu.memory_space<vmem>>) attributes {dimension_semantics = [], scalar_prefetch = 0 : i64, scratch_operands = 0 : i64, tpu.core_type = #tpu.core_type<tc>} {
    %c0 = arith.constant 0 : index
    %c0_0 = arith.constant 0 : index
    %0 = vector.load %arg1[%c0, %c0_0] : memref<32x32xf32, #tpu.memory_space<vmem>>, vector<32x32xf32>
    %1 = arith.truncf %0 : vector<32x32xf32> to vector<32x32xbf16>
    %c0_1 = arith.constant 0 : index
    %c0_2 = arith.constant 0 : index
    %2 = vector.load %arg2[%c0_1, %c0_2] : memref<32x32xf32, #tpu.memory_space<vmem>>, vector<32x32xf32>
    %3 = arith.truncf %2 : vector<32x32xf32> to vector<32x32xbf16>
    %cst = arith.constant dense<0.000000e+00> : vector<32x32xf32>
    %4 = tpu.matmul %1, %3, %cst {dimension_numbers = #tpu.dot_dimension_numbers<[1], [0], [0], [1], [0, 0, 1, 1], [], []>} : vector<32x32xbf16>, vector<32x32xbf16>, vector<32x32xf32> -> vector<32x32xf32>
    %5 = arith.truncf %4 : vector<32x32xf32> to vector<32x32xbf16>
    %c0_3 = arith.constant 0 : index
    %c0_4 = arith.constant 0 : index
    %6 = vector.load %arg3[%c0_3, %c0_4] : memref<32x32xf32, #tpu.memory_space<vmem>>, vector<32x32xf32>
    %7 = arith.truncf %6 : vector<32x32xf32> to vector<32x32xbf16>
    %cst_5 = arith.constant dense<0.000000e+00> : vector<32x32xf32>
    %8 = tpu.matmul %5, %7, %cst_5 {dimension_numbers = #tpu.dot_dimension_numbers<[1], [0], [0], [1], [0, 0, 1, 1], [], []>} : vector<32x32xbf16>, vector<32x32xbf16>, vector<32x32xf32> -> vector<32x32xf32>
    %c0_6 = arith.constant 0 : index
    %c0_7 = arith.constant 0 : index
    %9 = vector.load %arg4[%c0_6, %c0_7] : memref<1x32xf32, #tpu.memory_space<vmem>>, vector<1x32xf32>
    %10 = vector.broadcast %9 : vector<1x32xf32> to vector<32x32xf32>
    %11 = arith.addf %8, %10 : vector<32x32xf32>
    %cst_8 = arith.constant 0.000000e+00 : f32
    %12 = vector.broadcast %cst_8 : f32 to vector<32x32xf32>
    %13 = arith.maximumf %11, %12 : vector<32x32xf32>
    %14 = vector.extract_strided_slice %13 {offsets = [0, 0], sizes = [16, 32], strides = [1, 1]} : vector<32x32xf32> to vector<16x32xf32>
    %15 = vector.extract_strided_slice %13 {offsets = [16, 0], sizes = [16, 32], strides = [1, 1]} : vector<32x32xf32> to vector<16x32xf32>
    %16 = arith.truncf %14 : vector<16x32xf32> to vector<16x32xbf16>
    %c0_9 = arith.constant 0 : index
    %c0_10 = arith.constant 0 : index
    %17 = vector.load %arg5[%c0_9, %c0_10] : memref<64x32xf32, #tpu.memory_space<vmem>>, vector<32x32xf32>
    %18 = arith.truncf %17 : vector<32x32xf32> to vector<32x32xbf16>
    %cst_11 = arith.constant dense<0.000000e+00> : vector<16x32xf32>
    %19 = tpu.matmul %16, %18, %cst_11 {dimension_numbers = #tpu.dot_dimension_numbers<[1], [0], [0], [1], [0, 0, 1, 1], [], []>} : vector<16x32xbf16>, vector<32x32xbf16>, vector<16x32xf32> -> vector<16x32xf32>
    %20 = arith.truncf %15 : vector<16x32xf32> to vector<16x32xbf16>
    %c32 = arith.constant 32 : index
    %c0_12 = arith.constant 0 : index
    %21 = vector.load %arg5[%c32, %c0_12] : memref<64x32xf32, #tpu.memory_space<vmem>>, vector<32x32xf32>
    %22 = arith.truncf %21 : vector<32x32xf32> to vector<32x32xbf16>
    %cst_13 = arith.constant dense<0.000000e+00> : vector<16x32xf32>
    %23 = tpu.matmul %20, %22, %cst_13 {dimension_numbers = #tpu.dot_dimension_numbers<[1], [0], [0], [1], [0, 0, 1, 1], [], []>} : vector<16x32xbf16>, vector<32x32xbf16>, vector<16x32xf32> -> vector<16x32xf32>
    %24 = arith.addf %19, %23 : vector<16x32xf32>
    %c0_14 = arith.constant 0 : index
    %c0_15 = arith.constant 0 : index
    %25 = vector.load %arg6[%c0_14, %c0_15] : memref<1x32xf32, #tpu.memory_space<vmem>>, vector<1x32xf32>
    %26 = vector.broadcast %25 : vector<1x32xf32> to vector<16x32xf32>
    %27 = arith.addf %24, %26 : vector<16x32xf32>
    %cst_16 = arith.constant 0.000000e+00 : f32
    %28 = vector.broadcast %cst_16 : f32 to vector<16x32xf32>
    %29 = arith.maximumf %27, %28 : vector<16x32xf32>
    %c0_17 = arith.constant 0 : index
    %30 = memref.load %arg0[%c0_17] : memref<2xi32, #tpu.memory_space<smem>>
    %31 = vector.extract_strided_slice %29 {offsets = [0, 0], sizes = [8, 32], strides = [1, 1]} : vector<16x32xf32> to vector<8x32xf32>
    %32 = arith.truncf %31 : vector<8x32xf32> to vector<8x32xbf16>
    %33 = arith.index_cast %30 : i32 to index
    %c0_18 = arith.constant 0 : index
    %c0_19 = arith.constant 0 : index
    %34 = vector.load %arg7[%33, %c0_18, %c0_19] : memref<4x32x64xf32, #tpu.memory_space<vmem>>, vector<1x32x64xf32>
    %35 = vector.shape_cast %34 : vector<1x32x64xf32> to vector<32x64xf32>
    %36 = arith.truncf %35 : vector<32x64xf32> to vector<32x64xbf16>
    %cst_20 = arith.constant dense<0.000000e+00> : vector<8x64xf32>
    %37 = tpu.matmul %32, %36, %cst_20 {dimension_numbers = #tpu.dot_dimension_numbers<[1], [0], [0], [1], [0, 0, 1, 1], [], []>} : vector<8x32xbf16>, vector<32x64xbf16>, vector<8x64xf32> -> vector<8x64xf32>
    %38 = arith.index_cast %30 : i32 to index
    %c0_21 = arith.constant 0 : index
    %c0_22 = arith.constant 0 : index
    %39 = vector.load %arg8[%38, %c0_21, %c0_22] : memref<4x1x64xf32, #tpu.memory_space<vmem>>, vector<1x1x64xf32>
    %40 = vector.shape_cast %39 : vector<1x1x64xf32> to vector<1x64xf32>
    %41 = vector.broadcast %40 : vector<1x64xf32> to vector<8x64xf32>
    %42 = arith.addf %37, %41 : vector<8x64xf32>
    %cst_23 = arith.constant 0.000000e+00 : f32
    %43 = vector.broadcast %cst_23 : f32 to vector<8x64xf32>
    %44 = arith.maximumf %42, %43 : vector<8x64xf32>
    %45 = arith.truncf %44 : vector<8x64xf32> to vector<8x64xbf16>
    %46 = arith.index_cast %30 : i32 to index
    %c0_24 = arith.constant 0 : index
    %c0_25 = arith.constant 0 : index
    %47 = vector.load %arg9[%46, %c0_24, %c0_25] : memref<4x64x16xf32, #tpu.memory_space<vmem>>, vector<1x64x16xf32>
    %48 = vector.shape_cast %47 : vector<1x64x16xf32> to vector<64x16xf32>
    %49 = arith.truncf %48 : vector<64x16xf32> to vector<64x16xbf16>
    %cst_26 = arith.constant dense<0.000000e+00> : vector<8x16xf32>
    %50 = tpu.matmul %45, %49, %cst_26 {dimension_numbers = #tpu.dot_dimension_numbers<[1], [0], [0], [1], [0, 0, 1, 1], [], []>} : vector<8x64xbf16>, vector<64x16xbf16>, vector<8x16xf32> -> vector<8x16xf32>
    %51 = arith.index_cast %30 : i32 to index
    %c0_27 = arith.constant 0 : index
    %c0_28 = arith.constant 0 : index
    %52 = vector.load %arg10[%51, %c0_27, %c0_28] : memref<4x1x16xf32, #tpu.memory_space<vmem>>, vector<1x1x16xf32>
    %53 = vector.shape_cast %52 : vector<1x1x16xf32> to vector<1x16xf32>
    %54 = vector.broadcast %53 : vector<1x16xf32> to vector<8x16xf32>
    %55 = arith.addf %50, %54 : vector<8x16xf32>
    %c0_29 = arith.constant 0 : index
    %c0_30 = arith.constant 0 : index
    %c0_31 = arith.constant 0 : index
    %56 = vector.load %arg11[%c0_29, %c0_30, %c0_31] : memref<2x8x16xf32, #tpu.memory_space<vmem>>, vector<1x8x16xf32>
    %57 = vector.shape_cast %56 : vector<1x8x16xf32> to vector<8x16xf32>
    %58 = vector.shape_cast %55 : vector<8x16xf32> to vector<1x8x16xf32>
    tpu.vector_store %arg11[%c0_29, %c0_30, %c0_31], %58 {strides = array<i32>} : memref<2x8x16xf32, #tpu.memory_space<vmem>>, vector<1x8x16xf32>,
    %c1 = arith.constant 1 : index
    %59 = memref.load %arg0[%c1] : memref<2xi32, #tpu.memory_space<smem>>
    %60 = vector.extract_strided_slice %29 {offsets = [8, 0], sizes = [8, 32], strides = [1, 1]} : vector<16x32xf32> to vector<8x32xf32>
    %61 = arith.truncf %60 : vector<8x32xf32> to vector<8x32xbf16>
    %62 = arith.index_cast %59 : i32 to index
    %c0_32 = arith.constant 0 : index
    %c0_33 = arith.constant 0 : index
    %63 = vector.load %arg7[%62, %c0_32, %c0_33] : memref<4x32x64xf32, #tpu.memory_space<vmem>>, vector<1x32x64xf32>
    %64 = vector.shape_cast %63 : vector<1x32x64xf32> to vector<32x64xf32>
    %65 = arith.truncf %64 : vector<32x64xf32> to vector<32x64xbf16>
    %cst_34 = arith.constant dense<0.000000e+00> : vector<8x64xf32>
    %66 = tpu.matmul %61, %65, %cst_34 {dimension_numbers = #tpu.dot_dimension_numbers<[1], [0], [0], [1], [0, 0, 1, 1], [], []>} : vector<8x32xbf16>, vector<32x64xbf16>, vector<8x64xf32> -> vector<8x64xf32>
    %67 = arith.index_cast %59 : i32 to index
    %c0_35 = arith.constant 0 : index
    %c0_36 = arith.constant 0 : index
    %68 = vector.load %arg8[%67, %c0_35, %c0_36] : memref<4x1x64xf32, #tpu.memory_space<vmem>>, vector<1x1x64xf32>
    %69 = vector.shape_cast %68 : vector<1x1x64xf32> to vector<1x64xf32>
    %70 = vector.broadcast %69 : vector<1x64xf32> to vector<8x64xf32>
    %71 = arith.addf %66, %70 : vector<8x64xf32>
    %cst_37 = arith.constant 0.000000e+00 : f32
    %72 = vector.broadcast %cst_37 : f32 to vector<8x64xf32>
    %73 = arith.maximumf %71, %72 : vector<8x64xf32>
    %74 = arith.truncf %73 : vector<8x64xf32> to vector<8x64xbf16>
    %75 = arith.index_cast %59 : i32 to index
    %c0_38 = arith.constant 0 : index
    %c0_39 = arith.constant 0 : index
    %76 = vector.load %arg9[%75, %c0_38, %c0_39] : memref<4x64x16xf32, #tpu.memory_space<vmem>>, vector<1x64x16xf32>
    %77 = vector.shape_cast %76 : vector<1x64x16xf32> to vector<64x16xf32>
    %78 = arith.truncf %77 : vector<64x16xf32> to vector<64x16xbf16>
    %cst_40 = arith.constant dense<0.000000e+00> : vector<8x16xf32>
    %79 = tpu.matmul %74, %78, %cst_40 {dimension_numbers = #tpu.dot_dimension_numbers<[1], [0], [0], [1], [0, 0, 1, 1], [], []>} : vector<8x64xbf16>, vector<64x16xbf16>, vector<8x16xf32> -> vector<8x16xf32>
    %80 = arith.index_cast %59 : i32 to index
    %c0_41 = arith.constant 0 : index
    %c0_42 = arith.constant 0 : index
    %81 = vector.load %arg10[%80, %c0_41, %c0_42] : memref<4x1x16xf32, #tpu.memory_space<vmem>>, vector<1x1x16xf32>
    %82 = vector.shape_cast %81 : vector<1x1x16xf32> to vector<1x16xf32>
    %83 = vector.broadcast %82 : vector<1x16xf32> to vector<8x16xf32>
    %84 = arith.addf %79, %83 : vector<8x16xf32>
    %c1_43 = arith.constant 1 : index
    %c0_44 = arith.constant 0 : index
    %c0_45 = arith.constant 0 : index
    %85 = vector.load %arg11[%c1_43, %c0_44, %c0_45] : memref<2x8x16xf32, #tpu.memory_space<vmem>>, vector<1x8x16xf32>
    %86 = vector.shape_cast %85 : vector<1x8x16xf32> to vector<8x16xf32>
    %87 = vector.shape_cast %84 : vector<8x16xf32> to vector<1x8x16xf32>
    tpu.vector_store %arg11[%c1_43, %c0_44, %c0_45], %87 {strides = array<i32>} : memref<2x8x16xf32, #tpu.memory_space<vmem>>, vector<1x8x16xf32>,
    return
  }
}

</mosaic_0001>

<llo_original>
// kernel: tpu_custom_call.1
$region0: #{tpu_custom_call.1}
  #allocation0 [shape = 'u32[]', space=smem, size = 0x4, offset = 0x4, fixed_abs, tag = 'smem constant byte address 0x4 - core index']
  #allocation1 [shape = 'u32[72,128]{1,0:T(1,128)}', space=vmem, size = 0x9000, scoped, tag = 'internal scratch']
  %s0 = inlined_call_operand.vmem [shape: s32[2], index: 0, kind: input, shape index: {}]
  %s1 = inlined_call_operand.vmem [shape: f32[32,32], index: 1, kind: input, shape index: {}]
  %s2 = inlined_call_operand.vmem [shape: f32[32,32], index: 2, kind: input, shape index: {}]
  %s3 = inlined_call_operand.vmem [shape: f32[32,32], index: 3, kind: input, shape index: {}]
  %s4 = inlined_call_operand.vmem [shape: f32[1,32], index: 4, kind: input, shape index: {}]
  %s5 = inlined_call_operand.vmem [shape: f32[64,32], index: 5, kind: input, shape index: {}]
  %s6 = inlined_call_operand.vmem [shape: f32[1,32], index: 6, kind: input, shape index: {}]
  %s7 = inlined_call_operand.vmem [shape: f32[4,32,64], index: 7, kind: input, shape index: {}]
  %s8 = inlined_call_operand.vmem [shape: f32[4,1,64], index: 8, kind: input, shape index: {}]
  %s9 = inlined_call_operand.vmem [shape: f32[4,64,16], index: 9, kind: input, shape index: {}]
  %s10 = inlined_call_operand.vmem [shape: f32[4,1,16], index: 10, kind: input, shape index: {}]
  %s11 = inlined_call_operand.hbm [shape: f32[2,8,16], index: 11, kind: output, shape index: {}]
  %s12 = sld [smem:[#allocation0]]
  $region58: #{tpu_custom_call.1} parent=0
    _
  %s14 = ssub.s32 1, %s12
  %s15 = scalar_select 0, %s14, %s12
  $region1: #{tpu_custom_call.1} parent=0
    #allocation2 [shape = 'u8[512]{0}', space=smem, size = 0x200, scoped, tag = 'input window, operand 0, single buffered']
    #allocation3 [shape = 's32[1]{0}', space=sflag, size = 0x4, scoped, tag = 'scoped memory for tpu_custom_call.1']
    #allocation4 [shape = 's32[1]{0}', space=sflag, size = 0x4, scoped, tag = 'scoped memory for tpu_custom_call.1']
    #allocation5 [shape = 'u8[8192]{0}', space=vmem, size = 0x2000, scoped, tag = 'output window, operand 0, single buffered']
    %16 = vsyncpa [#allocation4], 0
    %17 = vsyncpa [#allocation3], 0
    // Predicated region
    $region2: #{tpu_custom_call.1} parent=1 // pred_check
      _
    $region3: #{tpu_custom_call.1} parent=1 // pred_check_branch
      %19 = sbr.rel (0) target = $region5
    $region4: #{tpu_custom_call.1} parent=1 // pred_region
      %21 = vsyncadd [#allocation4], 0
      %s23 = sshll.u32 %s0, 4
      %s24 = int_to_ptr.vmem [resolvable:$true] %s23
      %26 = dma.vmem_to_smem %s24, 16, [#allocation2], [#allocation4]
    $region5: #{tpu_custom_call.1} parent=1 // pred_fallthru
      _
    // Predicated region
    $region6: #{tpu_custom_call.1} parent=1 // pred_check
      _
    $region7: #{tpu_custom_call.1} parent=1 // pred_check_branch
      %28 = sbr.rel (0) target = $region9
    $region8: #{tpu_custom_call.1} parent=1 // pred_region
      _
    $region9: #{tpu_custom_call.1} parent=1 // pred_fallthru
      _
    // Predicated region
    $region10: #{tpu_custom_call.1} parent=1 // pred_check
      _
    $region11: #{tpu_custom_call.1} parent=1 // pred_check_branch
      %30 = sbr.rel (0) target = $region13
    $region12: #{tpu_custom_call.1} parent=1 // pred_region
      _
    $region13: #{tpu_custom_call.1} parent=1 // pred_fallthru
      _
    // Predicated region
    $region14: #{tpu_custom_call.1} parent=1 // pred_check
      _
    $region15: #{tpu_custom_call.1} parent=1 // pred_check_branch
      %32 = sbr.rel (0) target = $region17
    $region16: #{tpu_custom_call.1} parent=1 // pred_region
      _
    $region17: #{tpu_custom_call.1} parent=1 // pred_fallthru
      _
    // Predicated region
    $region18: #{tpu_custom_call.1} parent=1 // pred_check
      _
    $region19: #{tpu_custom_call.1} parent=1 // pred_check_branch
      %34 = sbr.rel (0) target = $region21
    $region20: #{tpu_custom_call.1} parent=1 // pred_region
      _
    $region21: #{tpu_custom_call.1} parent=1 // pred_fallthru
      _
    // Predicated region
    $region22: #{tpu_custom_call.1} parent=1 // pred_check
      _
    $region23: #{tpu_custom_call.1} parent=1 // pred_check_branch
      %36 = sbr.rel (0) target = $region25
    $region24: #{tpu_custom_call.1} parent=1 // pred_region
      _
    $region25: #{tpu_custom_call.1} parent=1 // pred_fallthru
      _
    // Predicated region
    $region26: #{tpu_custom_call.1} parent=1 // pred_check
      _
    $region27: #{tpu_custom_call.1} parent=1 // pred_check_branch
      %38 = sbr.rel (0) target = $region29
    $region28: #{tpu_custom_call.1} parent=1 // pred_region
      _
    $region29: #{tpu_custom_call.1} parent=1 // pred_fallthru
      _
    // Predicated region
    $region30: #{tpu_custom_call.1} parent=1 // pred_check
      _
    $region31: #{tpu_custom_call.1} parent=1 // pred_check_branch
      %40 = sbr.rel (0) target = $region33
    $region32: #{tpu_custom_call.1} parent=1 // pred_region
      _
    $region33: #{tpu_custom_call.1} parent=1 // pred_fallthru
      _
    // Predicated region
    $region34: #{tpu_custom_call.1} parent=1 // pred_check
      _
    $region35: #{tpu_custom_call.1} parent=1 // pred_check_branch
      %42 = sbr.rel (0) target = $region37
    $region36: #{tpu_custom_call.1} parent=1 // pred_region
      _
    $region37: #{tpu_custom_call.1} parent=1 // pred_fallthru
      _
    // Predicated region
    $region38: #{tpu_custom_call.1} parent=1 // pred_check
      _
    $region39: #{tpu_custom_call.1} parent=1 // pred_check_branch
      %44 = sbr.rel (0) target = $region41
    $region40: #{tpu_custom_call.1} parent=1 // pred_region
      _
    $region41: #{tpu_custom_call.1} parent=1 // pred_fallthru
      _
    // Predicated region
    $region42: #{tpu_custom_call.1} parent=1 // pred_check
      _
    $region43: #{tpu_custom_call.1} parent=1 // pred_check_branch
      %46 = sbr.rel (0) target = $region45
    $region44: #{tpu_custom_call.1} parent=1 // pred_region
      _
    $region45: #{tpu_custom_call.1} parent=1 // pred_fallthru
      _
    // Predicated region
    $region46: #{tpu_custom_call.1} parent=1 // pred_check
      _
    $region47: #{tpu_custom_call.1} parent=1 // pred_check_branch
      %48 = sbr.rel (0) target = $region49
    $region48: #{tpu_custom_call.1} parent=1 // pred_region
      %50 = dma.done [#allocation4], 16
    $region49: #{tpu_custom_call.1} parent=1 // pred_fallthru
      _
    %51 = sfence
    %v53 = vld [vmem:[%s1] sm:$0xff]
    %v54 = vld [vmem:[%s1 + $0x8] sm:$0xff]
    %v55 = vld [vmem:[%s1 + $0x10] sm:$0xff]
    %v56 = vld [vmem:[%s1 + $0x18] sm:$0xff]
    %v57 = vpack.c.bf16 %v54, %v53
    %v58 = vpack.c.bf16 %v56, %v55
    %v59 = vld [vmem:[%s2] sm:$0xff]
    %v60 = vld [vmem:[%s2 + $0x8] sm:$0xff]
    %v61 = vld [vmem:[%s2 + $0x10] sm:$0xff]
    %v62 = vld [vmem:[%s2 + $0x18] sm:$0xff]
    %v63 = vpack.c.bf16 %v60, %v59
    %v64 = vpack.c.bf16 %v62, %v61
    %vm65 = vcmask 261120
    %v67 = vsel %vm65, %v57, 0
    %v70 = vsel %vm65, %v58, 0
    %72 = vmatpush.bf16.msra.mxu0 0
    %73 = vmatpush.bf16.msra.mxu0 0
    %74 = vmatpush.bf16.msra.mxu0 0
    %75 = vmatpush.bf16.msra.mxu0 0
    %76 = vmatpush.bf16.msra.mxu0 0
    %77 = vmatpush.bf16.msra.mxu0 0
    %78 = vmatpush.bf16.msra.mxu0 %v64
    %79 = vmatpush.bf16.msra.mxu0 %v63
    %80 = vmatmul.bf16.gmra.mxu0 %v67
    %v81 = vpop.f32.mrf.mxu0
    %v82 = vadd.f32 0.0, %v81
    %v83 = vpop.f32.mrf.mxu0
    %v84 = vadd.f32 0.0, %v83
    %85 = vmatmul.bf16.gmra.mxu0 %v70
    %v86 = vpop.f32.mrf.mxu0
    %v87 = vadd.f32 0.0, %v86
    %v88 = vpop.f32.mrf.mxu0
    %v89 = vadd.f32 0.0, %v88
    %90 = vdwg.mxu0
    %v91 = vpack.c.bf16 %v84, %v82
    %v92 = vpack.c.bf16 %v89, %v87
    %v93 = vld [vmem:[%s3] sm:$0xff]
    %v94 = vld [vmem:[%s3 + $0x8] sm:$0xff]
    %v95 = vld [vmem:[%s3 + $0x10] sm:$0xff]
    %v96 = vld [vmem:[%s3 + $0x18] sm:$0xff]
    %v97 = vpack.c.bf16 %v94, %v93
    %v98 = vpack.c.bf16 %v96, %v95
    %v99 = vld [vmem:[%s4] sm:$0x1]
    %v101 = vperm.slane %v99, 0
    %v104 = vsel %vm65, %v91, 0
    %v107 = vsel %vm65, %v92, 0
    %109 = vmatpush.bf16.msra.mxu0 0
    %110 = vmatpush.bf16.msra.mxu0 0
    %111 = vmatpush.bf16.msra.mxu0 0
    %112 = vmatpush.bf16.msra.mxu0 0
    %113 = vmatpush.bf16.msra.mxu0 0
    %114 = vmatpush.bf16.msra.mxu0 0
    %115 = vmatpush.bf16.msra.mxu0 %v98
    %116 = vmatpush.bf16.msra.mxu0 %v97
    %117 = vmatmul.bf16.gmra.mxu0 %v104
    %v118 = vpop.f32.mrf.mxu0
    %v119 = vadd.f32 %v101, %v118
    %v120 = vpop.f32.mrf.mxu0
    %v121 = vadd.f32 %v101, %v120
    %122 = vmatmul.bf16.gmra.mxu0 %v107
    %v123 = vpop.f32.mrf.mxu0
    %v124 = vadd.f32 %v101, %v123
    %v125 = vpop.f32.mrf.mxu0
    %v126 = vadd.f32 %v101, %v125
    %127 = vdwg.mxu0
    %v128 = vmax.f32 %v119, 0.0
    %v129 = vmax.f32 %v121, 0.0
    %v130 = vmax.f32 %v124, 0.0
    %v131 = vmax.f32 %v126, 0.0
    %v132 = vpack.c.bf16 %v129, %v128
    %v133 = vld [vmem:[%s5] sm:$0xff]
    %v134 = vld [vmem:[%s5 + $0x8] sm:$0xff]
    %v135 = vld [vmem:[%s5 + $0x10] sm:$0xff]
    %v136 = vld [vmem:[%s5 + $0x18] sm:$0xff]
    %v137 = vpack.c.bf16 %v134, %v133
    %v138 = vpack.c.bf16 %v136, %v135
    %v139 = vpack.c.bf16 %v131, %v130
    %v140 = vld [vmem:[%s5 + $0x20] sm:$0xff]
    %v141 = vld [vmem:[%s5 + $0x28] sm:$0xff]
    %v142 = vld [vmem:[%s5 + $0x30] sm:$0xff]
    %v143 = vld [vmem:[%s5 + $0x38] sm:$0xff]
    %v144 = vpack.c.bf16 %v141, %v140
    %v145 = vpack.c.bf16 %v143, %v142
    %v147 = vsel %vm65, %v139, 0
    %149 = vmatpush.bf16.msra.mxu0 0
    %150 = vmatpush.bf16.msra.mxu0 0
    %151 = vmatpush.bf16.msra.mxu0 0
    %152 = vmatpush.bf16.msra.mxu0 0
    %153 = vmatpush.bf16.msra.mxu0 0
    %154 = vmatpush.bf16.msra.mxu0 0
    %155 = vmatpush.bf16.msra.mxu0 %v145
    %156 = vmatpush.bf16.msra.mxu0 %v144
    %157 = vmatmul.bf16.gmra.mxu0 %v147
    %v158 = vpop.f32.mrf.mxu0
    %v159 = vadd.f32 0.0, %v158
    %v160 = vpop.f32.mrf.mxu0
    %v161 = vadd.f32 0.0, %v160
    %162 = vdwg.mxu0
    %v164 = vsel %vm65, %v132, 0
    %166 = vmatpush.bf16.msra.mxu0 0
    %167 = vmatpush.bf16.msra.mxu0 0
    %168 = vmatpush.bf16.msra.mxu0 0
    %169 = vmatpush.bf16.msra.mxu0 0
    %170 = vmatpush.bf16.msra.mxu0 0
    %171 = vmatpush.bf16.msra.mxu0 0
    %172 = vmatpush.bf16.msra.mxu0 %v138
    %173 = vmatpush.bf16.msra.mxu0 %v137
    %174 = vmatmul.bf16.gmra.mxu0 %v164
    %v175 = vpop.f32.mrf.mxu0
    %v176 = vadd.f32 %v159, %v175
    %v177 = vpop.f32.mrf.mxu0
    %v178 = vadd.f32 %v161, %v177
    %179 = vdwg.mxu0
    %v180 = vld [vmem:[%s6] sm:$0x1]
    %v182 = vperm.slane %v180, 0
    %v184 = vadd.f32 %v176, %v182
    %v185 = vadd.f32 %v178, %v182
    %v186 = vmax.f32 %v184, 0.0
    %v187 = vmax.f32 %v185, 0.0
    %s188 = sld [smem:[#allocation2]]
    %v189 = vpack.c.bf16 %v186, %v186
    %s190 = smul.u32 %s188, 32
    %s191 = scalar_lea.vmem %s7, %s190
    %v192 = vld [vmem:[%s191] sm:$0xff]
    %v193 = vld [vmem:[%s191 + $0x8] sm:$0xff]
    %v194 = vld [vmem:[%s191 + $0x10] sm:$0xff]
    %v195 = vld [vmem:[%s191 + $0x18] sm:$0xff]
    %v196 = vpack.c.bf16 %v193, %v192
    %v197 = vpack.c.bf16 %v195, %v194
    %s198 = scalar_lea.vmem %s8, %s188
    %v199 = vld [vmem:[%s198] sm:$0x1]
    %v201 = vperm.slane %v199, 0
    %v204 = vsel %vm65, %v189, 0
    %206 = vmatpush.bf16.msra.mxu0 0
    %207 = vmatpush.bf16.msra.mxu0 0
    %208 = vmatpush.bf16.msra.mxu0 0
    %209 = vmatpush.bf16.msra.mxu0 0
    %210 = vmatpush.bf16.msra.mxu0 0
    %211 = vmatpush.bf16.msra.mxu0 0
    %212 = vmatpush.bf16.msra.mxu0 %v197
    %213 = vmatpush.bf16.msra.mxu0 %v196
    %214 = vmatmul.bf16.gmra.mxu0 %v204
    %v215 = vpop.f32.mrf.mxu0
    %v216 = vadd.f32 %v201, %v215
    %v217 = vpop.f32.mrf.mxu0
    %218 = vdwg.mxu0
    %v219 = vmax.f32 %v216, 0.0
    %v220 = vpack.c.bf16 %v219, %v219
    %s221 = smul.u32 %s188, 64
    %s222 = scalar_lea.vmem %s9, %s221
    %v223 = vld [vmem:[%s222] sm:$0xff]
    %v224 = vld [vmem:[%s222 + $0x8] sm:$0xff]
    %v225 = vld [vmem:[%s222 + $0x10] sm:$0xff]
    %v226 = vld [vmem:[%s222 + $0x18] sm:$0xff]
    %v227 = vld [vmem:[%s222 + $0x20] sm:$0xff]
    %v228 = vld [vmem:[%s222 + $0x28] sm:$0xff]
    %v229 = vld [vmem:[%s222 + $0x30] sm:$0xff]
    %v230 = vld [vmem:[%s222 + $0x38] sm:$0xff]
    %v231 = vpack.c.bf16 %v224, %v223
    %v232 = vpack.c.bf16 %v226, %v225
    %v233 = vpack.c.bf16 %v228, %v227
    %v234 = vpack.c.bf16 %v230, %v229
    %s235 = scalar_lea.vmem %s10, %s188
    %v236 = vld [vmem:[%s235] sm:$0x1]
    %v238 = vperm.slane %v236, 0
    %vm240 = vcmask 523264
    %v242 = vsel %vm240, %v220, 0
    %244 = vmatpush.bf16.msra.mxu0 0
    %245 = vmatpush.bf16.msra.mxu0 0
    %246 = vmatpush.bf16.msra.mxu0 0
    %247 = vmatpush.bf16.msra.mxu0 0
    %248 = vmatpush.bf16.msra.mxu0 %v234
    %249 = vmatpush.bf16.msra.mxu0 %v233
    %250 = vmatpush.bf16.msra.mxu0 %v232
    %251 = vmatpush.bf16.msra.mxu0 %v231
    %252 = vmatmul.bf16.gmra.mxu0 %v242
    %v253 = vpop.f32.mrf.mxu0
    %v254 = vadd.f32 %v238, %v253
    %v255 = vpop.f32.mrf.mxu0
    %256 = vdwg.mxu0
    %vm257 = vcmask 130048
    %258 = vst.msk [vmem:[#allocation5] sm:$0xff] %vm257, %v254
    %s259 = sld [smem:[#allocation2 + $0x1]]
    %v260 = vpack.c.bf16 %v187, %v187
    %s261 = smul.u32 %s259, 32
    %s262 = scalar_lea.vmem %s7, %s261
    %v263 = vld [vmem:[%s262] sm:$0xff]
    %v264 = vld [vmem:[%s262 + $0x8] sm:$0xff]
    %v265 = vld [vmem:[%s262 + $0x10] sm:$0xff]
    %v266 = vld [vmem:[%s262 + $0x18] sm:$0xff]
    %v267 = vpack.c.bf16 %v264, %v263
    %v268 = vpack.c.bf16 %v266, %v265
    %s269 = scalar_lea.vmem %s8, %s259
    %v270 = vld [vmem:[%s269] sm:$0x1]
    %v272 = vperm.slane %v270, 0
    %v275 = vsel %vm65, %v260, 0
    %277 = vmatpush.bf16.msra.mxu0 0
    %278 = vmatpush.bf16.msra.mxu0 0
    %279 = vmatpush.bf16.msra.mxu0 0
    %280 = vmatpush.bf16.msra.mxu0 0
    %281 = vmatpush.bf16.msra.mxu0 0
    %282 = vmatpush.bf16.msra.mxu0 0
    %283 = vmatpush.bf16.msra.mxu0 %v268
    %284 = vmatpush.bf16.msra.mxu0 %v267
    %285 = vmatmul.bf16.gmra.mxu0 %v275
    %v286 = vpop.f32.mrf.mxu0
    %v287 = vadd.f32 %v272, %v286
    %v288 = vpop.f32.mrf.mxu0
    %289 = vdwg.mxu0
    %v290 = vmax.f32 %v287, 0.0
    %v291 = vpack.c.bf16 %v290, %v290
    %s292 = smul.u32 %s259, 64
    %s293 = scalar_lea.vmem %s9, %s292
    %v294 = vld [vmem:[%s293] sm:$0xff]
    %v295 = vld [vmem:[%s293 + $0x8] sm:$0xff]
    %v296 = vld [vmem:[%s293 + $0x10] sm:$0xff]
    %v297 = vld [vmem:[%s293 + $0x18] sm:$0xff]
    %v298 = vld [vmem:[%s293 + $0x20] sm:$0xff]
    %v299 = vld [vmem:[%s293 + $0x28] sm:$0xff]
    %v300 = vld [vmem:[%s293 + $0x30] sm:$0xff]
    %v301 = vld [vmem:[%s293 + $0x38] sm:$0xff]
    %v302 = vpack.c.bf16 %v295, %v294
    %v303 = vpack.c.bf16 %v297, %v296
    %v304 = vpack.c.bf16 %v299, %v298
    %v305 = vpack.c.bf16 %v301, %v300
    %s306 = scalar_lea.vmem %s10, %s259
    %v307 = vld [vmem:[%s306] sm:$0x1]
    %v309 = vperm.slane %v307, 0
    %v312 = vsel %vm240, %v291, 0
    %314 = vmatpush.bf16.msra.mxu0 0
    %315 = vmatpush.bf16.msra.mxu0 0
    %316 = vmatpush.bf16.msra.mxu0 0
    %317 = vmatpush.bf16.msra.mxu0 0
    %318 = vmatpush.bf16.msra.mxu0 %v305
    %319 = vmatpush.bf16.msra.mxu0 %v304
    %320 = vmatpush.bf16.msra.mxu0 %v303
    %321 = vmatpush.bf16.msra.mxu0 %v302
    %322 = vmatmul.bf16.gmra.mxu0 %v312
    %v323 = vpop.f32.mrf.mxu0
    %v324 = vadd.f32 %v309, %v323
    %v325 = vpop.f32.mrf.mxu0
    %326 = vdwg.mxu0
    %s327 = scalar_lea.vmem [#allocation5], 8
    %328 = vst.msk [vmem:[%s327] sm:$0xff] %vm257, %v324
    // Predicated region
    $region50: #{tpu_custom_call.1} parent=1 // pred_check
      _
    $region51: #{tpu_custom_call.1} parent=1 // pred_check_branch
      %330 = sbr.rel (0) target = $region53
    $region52: #{tpu_custom_call.1} parent=1 // pred_region
      %332 = vsyncadd [#allocation3], 0
      %s333 = sshll.u32 [#allocation5], 4
      %s334 = int_to_ptr.vmem [resolvable:$true] %s333
      %s335 = sshll.u32 %s11, 4
      %s336 = int_to_ptr.hbm [resolvable:$true] %s335
      %341 = dma.vmem_to_hbm [thread:$0]  %s334, 256, %s336, [#allocation3], 128, 128, 8
    $region53: #{tpu_custom_call.1} parent=1 // pred_fallthru
      _
    // Predicated region
    $region54: #{tpu_custom_call.1} parent=1 // pred_check
      _
    $region55: #{tpu_custom_call.1} parent=1 // pred_check_branch
      %343 = sbr.rel (0) target = $region57
    $region56: #{tpu_custom_call.1} parent=1 // pred_region
      %345 = dma.done [#allocation3], 256
    $region57: #{tpu_custom_call.1} parent=1 // pred_fallthru
      _
    %346 = vsyncpa [#allocation3], 1
    %347 = vsyncpa [#allocation4], 1

</llo_original>
